<compile_context>
chip_gen: v6e
topology: v6e:2x2x1
jax: 0.10.0
libtpu: 0.0.40
codegen_flags: <defaults>
</compile_context>

<pallas_src>
import jax
import jax.numpy as jnp
from jax import lax
from jax.experimental import pallas as pl
from jax.experimental.pallas import tpu as pltpu


def _round_up(x: int, m: int) -> int:
    return ((x + m - 1) // m) * m


def mlp_kernel(x_ref, p_ref, o_ref):
    # x: [TB, 5]   p: [16, 8] packed params   o: [1, TB]
    x = x_ref[...]
    p = p_ref[...]
    w1 = p[:, 0:5]        # [16, 5]   fc1 weight (torch [out, in] layout)
    b1 = p[:, 5:6]        # [16, 1]   fc1 bias (broadcasts over lanes)
    w2 = p[:, 6:7]        # [16, 1]   fc2 weight as a column
    b2 = p[0:1, 7:8]      # [1, 1]    fc2 bias

    # h = w1 @ x^T : contract w1 dim 1 (in=5) with x dim 1 (features=5) -> [16, TB]
    h = lax.dot_general(
        w1, x,
        dimension_numbers=(((1,), (1,)), ((), ())),
        preferred_element_type=jnp.float32,
        precision=lax.Precision.HIGHEST,
    )
    h = jnp.maximum(h + b1, 0.0)  # bias + ReLU, lane-dense [16, TB]

    # y = w2^T @ h : contract the 16-dim -> [1, TB] (lane-dense output block)
    y = lax.dot_general(
        w2, h,
        dimension_numbers=(((0,), (0,)), ((), ())),
        preferred_element_type=jnp.float32,
        precision=lax.Precision.HIGHEST,
    )
    o_ref[...] = (y + b2).astype(o_ref.dtype)


def covid_predictor(x, w1, b1, w2, b2, *, tb=None):
    """x: [B, 5] f32; w1: [16, 5]; b1: [16]; w2: [1, 16]; b2: [1] -> [B, 1]."""
    B, F = x.shape
    assert F == 5 and w1.shape == (16, 5) and b1.shape == (16,)
    assert w2.shape == (1, 16) and b2.shape == (1,)

    if tb is None:
        # Big tiles (mem-bound kernel) but keep >=~4 grid steps when possible so
        # the "parallel" grid axis can shard across TensorCores.  Cap at 8192 so
        # double-buffered, lane-padded x (~1 KiB/row) fits every generation's
        # default scoped VMEM (v5e ~16 MiB, v6e/v7x 32 MiB).
        tb = min(8192, max(128, _round_up(pl.cdiv(B, 4), 128)))
    assert tb % 128 == 0 and tb >= 128, "tb must be a multiple of 128"

    n_tiles = pl.cdiv(B, tb)

    # Pack all parameters into one small (16, 8) f32 block:
    #   cols 0:5 = w1, col 5 = b1, col 6 = w2 (as a column), [0,7] = b2.
    params = jnp.zeros((16, 8), jnp.float32)
    params = params.at[:, 0:5].set(w1.astype(jnp.float32))
    params = params.at[:, 5].set(b1.astype(jnp.float32))
    params = params.at[:, 6].set(w2[0].astype(jnp.float32))
    params = params.at[0, 7].set(b2[0].astype(jnp.float32))

    out = pl.pallas_call(
        mlp_kernel,
        out_shape=jax.ShapeDtypeStruct((1, B), jnp.float32),
        grid=(n_tiles,),
        in_specs=[
            pl.BlockSpec((tb, 5), lambda i: (i, 0)),   # x tile (boundary masked)
            pl.BlockSpec((16, 8), lambda i: (0, 0)),   # packed params, resident
        ],
        out_specs=pl.BlockSpec((1, tb), lambda i: (0, i)),  # lane-dense output
        compiler_params=pltpu.CompilerParams(
            dimension_semantics=("parallel",),          # shard grid across TCs
        ),
    )(x, params)

    # Back to PyTorch's [B, 1] layout.
    return out[0, :].reshape(B, 1)


def reference(x, w1, b1, w2, b2):
    h = jnp.maximum(x @ w1.T + b1, 0.0)
    return h @ w2.T + b2


if __name__ == "__main__":
    key = jax.random.PRNGKey(0)
    kx, k1, k2, k3, k4 = jax.random.split(key, 5)

    B = 300  # not a multiple of the batch tile -> exercises boundary masking
    x = jax.random.normal(kx, (B, 5), dtype=jnp.float32)

    # Deterministic parameter init (PyTorch-like uniform bounds).
    bound1 = 1.0 / (5.0 ** 0.5)
    w1 = jax.random.uniform(k1, (16, 5), jnp.float32, -bound1, bound1)
    b1 = jax.random.uniform(k2, (16,), jnp.float32, -bound1, bound1)
    bound2 = 1.0 / (16.0 ** 0.5)
    w2 = jax.random.uniform(k3, (1, 16), jnp.float32, -bound2, bound2)
    b2 = jax.random.uniform(k4, (1,), jnp.float32, -bound2, bound2)

    out = covid_predictor(x, w1, b1, w2, b2)
    jax.block_until_ready(out)

    ref = reference(x, w1, b1, w2, b2)
    assert out.shape == (B, 1), out.shape
    assert jnp.allclose(out, ref, atol=1e-5, rtol=1e-5), (out, ref)
    print("KERNEL_OK")
</pallas_src>

<mosaic_0001>
module attributes {stable_mosaic.version = 11 : i64} {
  func.func @mlp_kernel(%arg0: i32, %arg1: memref<128x5xf32, #tpu.memory_space<vmem>>, %arg2: memref<16x8xf32, #tpu.memory_space<vmem>>, %arg3: memref<1x128xf32, #tpu.memory_space<vmem>>) attributes {dimension_semantics = [#tpu.dimension_semantics<parallel>], iteration_bounds = array<i64: 3>, scalar_prefetch = 0 : i64, scratch_operands = 0 : i64, tpu.core_type = #tpu.core_type<tc>, window_params = [{transform_indices = @transform_0, window_bounds = array<i64: 128, 5>}, {pipeline_mode = #tpu.pipeline_mode<synchronous>, transform_indices = @transform_1, window_bounds = array<i64: 16, 8>}, {transform_indices = @transform_2, window_bounds = array<i64: 1, 128>}]} {
    %c0 = arith.constant 0 : index
    %c0_0 = arith.constant 0 : index
    %0 = vector.load %arg1[%c0, %c0_0] : memref<128x5xf32, #tpu.memory_space<vmem>>, vector<128x5xf32>
    %c0_1 = arith.constant 0 : index
    %c0_2 = arith.constant 0 : index
    %1 = vector.load %arg2[%c0_1, %c0_2] : memref<16x8xf32, #tpu.memory_space<vmem>>, vector<16x8xf32>
    %2 = vector.extract_strided_slice %1 {offsets = [0, 0], sizes = [16, 5], strides = [1, 1]} : vector<16x8xf32> to vector<16x5xf32>
    %3 = vector.extract_strided_slice %1 {offsets = [0, 5], sizes = [16, 1], strides = [1, 1]} : vector<16x8xf32> to vector<16x1xf32>
    %4 = vector.extract_strided_slice %1 {offsets = [0, 6], sizes = [16, 1], strides = [1, 1]} : vector<16x8xf32> to vector<16x1xf32>
    %5 = vector.extract_strided_slice %1 {offsets = [0, 7], sizes = [1, 1], strides = [1, 1]} : vector<16x8xf32> to vector<1x1xf32>
    %cst = arith.constant dense<0.000000e+00> : vector<16x128xf32>
    %6 = tpu.matmul %2, %0, %cst {dimension_numbers = #tpu.dot_dimension_numbers<[1], [1], [0], [0], [0, 0, 1, 0], [], []>, precision = #tpu.contract_precision<fp32>} : vector<16x5xf32>, vector<128x5xf32>, vector<16x128xf32> -> vector<16x128xf32>
    %7 = vector.broadcast %3 : vector<16x1xf32> to vector<16x128xf32>
    %8 = arith.addf %6, %7 : vector<16x128xf32>
    %cst_3 = arith.constant 0.000000e+00 : f32
    %9 = vector.broadcast %cst_3 : f32 to vector<16x128xf32>
    %10 = arith.maximumf %8, %9 : vector<16x128xf32>
    %cst_4 = arith.constant dense<0.000000e+00> : vector<1x128xf32>
    %11 = tpu.matmul %4, %10, %cst_4 {dimension_numbers = #tpu.dot_dimension_numbers<[0], [0], [1], [1], [0, 1, 1, 1], [], []>, precision = #tpu.contract_precision<fp32>} : vector<16x1xf32>, vector<16x128xf32>, vector<1x128xf32> -> vector<1x128xf32>
    %12 = vector.broadcast %5 : vector<1x1xf32> to vector<1x128xf32>
    %13 = arith.addf %11, %12 : vector<1x128xf32>
    %c0_5 = arith.constant 0 : index
    %c0_6 = arith.constant 0 : index
    %14 = vector.load %arg3[%c0_5, %c0_6] : memref<1x128xf32, #tpu.memory_space<vmem>>, vector<1x128xf32>
    tpu.vector_store %arg3[%c0_5, %c0_6], %13 {strides = array<i32>} : memref<1x128xf32, #tpu.memory_space<vmem>>, vector<1x128xf32>,
    return
  }
  func.func @transform_0(%arg0: i32) -> (i32, i32) {
    %c0_i32 = arith.constant 0 : i32
    %c0_i32_0 = arith.constant 0 : i32
    return %arg0, %c0_i32 : i32, i32
  }
  func.func @transform_1(%arg0: i32) -> (i32, i32) {
    %c0_i32 = arith.constant 0 : i32
    %c0_i32_0 = arith.constant 0 : i32
    %c0_i32_1 = arith.constant 0 : i32
    return %c0_i32, %c0_i32_0 : i32, i32
  }
  func.func @transform_2(%arg0: i32) -> (i32, i32) {
    %c0_i32 = arith.constant 0 : i32
    %c0_i32_0 = arith.constant 0 : i32
    return %c0_i32, %arg0 : i32, i32
  }
}

</mosaic_0001>

<llo_original>
// kernel: tpu_custom_call.1
$region0: #{tpu_custom_call.1}
  #allocation0 [shape = 'u32[]', space=smem, size = 0x4, offset = 0x4, fixed_abs, tag = 'smem constant byte address 0x4 - core index']
  #allocation1 [shape = 'u32[144,128]{1,0:T(1,128)}', space=vmem, size = 0x12000, scoped, tag = 'internal scratch']
  %s0 = inlined_call_operand.vmem [shape: f32[300,5], index: 0, kind: input, shape index: {}]
  %s1 = inlined_call_operand.vmem [shape: f32[16,8], index: 1, kind: input, shape index: {}]
  %s2 = inlined_call_operand.hbm [shape: f32[1,300], index: 2, kind: output, shape index: {}]
  %s3 = sld [smem:[#allocation0]]
  $region41: #{tpu_custom_call.1} parent=0
    _
  %s5 = ssub.s32 1, %s3
  %s6 = scalar_select 0, %s5, %s3
  $region1: #{tpu_custom_call.1} parent=0
    #allocation2 [shape = 'u8[1024]{0}', space=vmem, size = 0x400, scoped, tag = 'output window, operand 0']
    #allocation3 [shape = 's32[2]{0}', space=sflag, size = 0x8, scoped, tag = 'scoped memory for tpu_custom_call.1']
    %7 = vsyncpa [#allocation3], 0
    %s8 = scalar_lea.sflag [#allocation3], 1
    %9 = vsyncpa %s8, 0
    loop: start=0, step=1, limit=5
    $region2: #{tpu_custom_call.1} parent=1 // loop_pre_header
      _
    $region3: #{tpu_custom_call.1} parent=1 // loop_header
      %s11 = sphi 0, %s15
      %p12 = scmp.ge.s32.totalorder %s11, 5
      %s21 = sphi 0, %s23
      %s24 = sphi 0, %s21
      %s25 = sphi 0, %s24
      %s41 = sphi 0, %s25
      %s45 = sphi 0, %s45
      %s47 = sphi 0, %s45
      %s48 = sphi 0, %s47
      %s62 = sphi 0, %s48
      %s68 = sphi 0, %s70
      %s71 = sphi 0, %s68
      %s72 = sphi 0, %s71
      %s88 = sphi 0, %s72
    $region4: #{tpu_custom_call.1} parent=1 // loop_header_branch
      %14 = sbr.rel (%p12) target = $region8
    $region5: #{tpu_custom_call.1} parent=1 // loop_body
      %s16 = ssub.s32 %s11, 1
      %s17 = ssub.s32 %s11, 2
      %s18 = sadd.s32 %s11, 1
      %s19 = ssub.s32 %s11, %s18
      %p20 = scmp.eq.s32.totalorder %s19, 0
      %s22 = sadd.s32 %s21, 1
      %s23 = scalar_select %p20, %s21, %s22
      %p26 = pneg %p20
      %p27 = scmp.eq.s32.totalorder %s11, 2
      %p28 = por %p26, %p27
      %p29 = scmp.ne.s32.totalorder %s21, %s24
      %p30 = scmp.eq.s32.totalorder %s11, 0
      %p31 = por %p29, %p30
      %p32 = scmp.ne.s32.totalorder %s21, %s24
      %p33 = scmp.eq.s32.totalorder %s16, 2
      %p34 = por %p32, %p33
      %p35 = scmp.ne.s32.totalorder %s24, %s25
      %p36 = scmp.eq.s32.totalorder %s16, 0
      %p37 = por %p35, %p36
      %p38 = scmp.ne.s32.totalorder %s24, %s25
      %p39 = scmp.eq.s32.totalorder %s17, 2
      %p40 = por %p38, %p39
      %p42 = scmp.ne.s32.totalorder %s25, %s41
      %p43 = scmp.eq.s32.totalorder %s17, 0
      %p44 = por %p42, %p43
      %s46 = sadd.s32 %s45, 1
      %p49 = scmp.eq.s32.totalorder %s11, 2
      %p50 = scmp.ne.s32.totalorder %s45, %s47
      %p51 = scmp.eq.s32.totalorder %s11, 0
      %p52 = por %p50, %p51
      %p53 = scmp.ne.s32.totalorder %s45, %s47
      %p54 = scmp.eq.s32.totalorder %s16, 2
      %p55 = por %p53, %p54
      %p56 = scmp.ne.s32.totalorder %s47, %s48
      %p57 = scmp.eq.s32.totalorder %s16, 0
      %p58 = por %p56, %p57
      %p59 = scmp.ne.s32.totalorder %s47, %s48
      %p60 = scmp.eq.s32.totalorder %s17, 2
      %p61 = por %p59, %p60
      %p63 = scmp.ne.s32.totalorder %s48, %s62
      %p64 = scmp.eq.s32.totalorder %s17, 0
      %p65 = por %p63, %p64
      %s66 = ssub.s32 %s11, %s18
      %p67 = scmp.eq.s32.totalorder %s66, 0
      %s69 = sadd.s32 %s68, 1
      %s70 = scalar_select %p67, %s68, %s69
      %p73 = pneg %p67
      %p74 = scmp.eq.s32.totalorder %s11, 2
      %p75 = por %p73, %p74
      %p76 = scmp.ne.s32.totalorder %s68, %s71
      %p77 = scmp.eq.s32.totalorder %s11, 0
      %p78 = por %p76, %p77
      %p79 = scmp.ne.s32.totalorder %s68, %s71
      %p80 = scmp.eq.s32.totalorder %s16, 2
      %p81 = por %p79, %p80
      %p82 = scmp.ne.s32.totalorder %s71, %s72
      %p83 = scmp.eq.s32.totalorder %s16, 0
      %p84 = por %p82, %p83
      %p85 = scmp.ne.s32.totalorder %s71, %s72
      %p86 = scmp.eq.s32.totalorder %s17, 2
      %p87 = por %p85, %p86
      %p89 = scmp.ne.s32.totalorder %s72, %s88
      %p90 = scmp.eq.s32.totalorder %s17, 0
      %p91 = por %p89, %p90
      %p92 = scmp.le.s32.totalorder 1, %s11
      %p93 = scmp.lt.s32.totalorder %s11, 4
      %p94 = pnand %p92, %p93
      %p95 = pneg %p94
      // Predicated region
      $region9: #{tpu_custom_call.1} parent=5 // pred_check
        _
      $region10: #{tpu_custom_call.1} parent=5 // pred_check_branch
        %97 = sbr.rel (%p94) target = $region12
      $region11: #{tpu_custom_call.1} parent=5 // pred_region
        %s98 = ssub.s32 %s11, 1
        // Predicated region
        $region13: #{tpu_custom_call.1} parent=11 // pred_check
          %p99 = pneg %p58
        $region14: #{tpu_custom_call.1} parent=11 // pred_check_branch
          %101 = sbr.rel (%p99) target = $region16
        $region15: #{tpu_custom_call.1} parent=11 // pred_region
          _
        $region16: #{tpu_custom_call.1} parent=11 // pred_fallthru
          _
      $region12: #{tpu_custom_call.1} parent=5 // pred_fallthru
        _
      %p102 = scmp.lt.s32.totalorder %s11, 3
      // Predicated region
      $region17: #{tpu_custom_call.1} parent=5 // pred_check
        %p103 = pneg %p102
      $region18: #{tpu_custom_call.1} parent=5 // pred_check_branch
        %105 = sbr.rel (%p103) target = $region20
      $region19: #{tpu_custom_call.1} parent=5 // pred_region
        // Predicated region
        $region21: #{tpu_custom_call.1} parent=19 // pred_check
          %p106 = pneg %p31
        $region22: #{tpu_custom_call.1} parent=19 // pred_check_branch
          %108 = sbr.rel (%p106) target = $region24
        $region23: #{tpu_custom_call.1} parent=19 // pred_region
          %s109 = smul.u32 16, %s11
          %s110 = ssub.s32 38, %s109
          %p111 = scmp.lt.s32.totalorder %s110, 16
          %s112 = scalar_select %p111, %s110, 16
          %s113 = smul.u32 128, %s112
          %p114 = scmp.lt.s32.totalorder %s109, 37
          %s115 = scalar_select %p114, %s109, 37
          %s116 = smul.addr %s115, 8
          %s117 = scalar_lea.vmem %s0, %s116
          %s118 = smul.u32 16, %s11
          %s119 = ssub.s32 38, %s118
          %p120 = scmp.lt.s32.totalorder %s119, 16
          %s121 = scalar_select %p120, %s119, 16
          %s122 = smul.u32 128, %s121
        $region24: #{tpu_custom_call.1} parent=19 // pred_fallthru
          _
      $region20: #{tpu_custom_call.1} parent=5 // pred_fallthru
        _
      %p123 = scmp.le.s32.totalorder 1, %s11
      %p124 = scmp.lt.s32.totalorder %s11, 4
      %p125 = pnand %p123, %p124
      %p126 = pneg %p125
      // Predicated region
      $region25: #{tpu_custom_call.1} parent=5 // pred_check
        _
      $region26: #{tpu_custom_call.1} parent=5 // pred_check_branch
        %128 = sbr.rel (%p125) target = $region28
      $region27: #{tpu_custom_call.1} parent=5 // pred_region
        %s129 = ssub.s32 %s11, 1
        %s130 = smul.u32 16, %s16
        %s131 = ssub.s32 38, %s130
        %p132 = scmp.lt.s32.totalorder %s131, 16
        %s133 = scalar_select %p132, %s131, 16
        %s134 = smul.u32 128, %s133
        %p135 = scmp.lt.s32.totalorder %s130, 37
        %s136 = scalar_select %p135, %s130, 37
        %s137 = smul.addr %s136, 8
        %s138 = scalar_lea.vmem %s0, %s137
        %p139 = pneg %p37
        %p140 = pneg %p34
        %p141 = pneg %p58
        %p142 = pneg %p55
        %p143 = pneg %p84
        %p144 = pneg %p81
        %s145 = sand.u32 %s71, 1
        %s146 = scalar_lea.sflag [#allocation3], %s145
        %s147 = sand.u32 %s71, 1
        %s148 = scalar_lea.vmem [#allocation2], %s147
        %s149 = smul.u32 16, %s16
        %s150 = ssub.s32 38, %s149
        %p151 = scmp.lt.s32.totalorder %s150, 16
        %s152 = scalar_select %p151, %s150, 16
        %s153 = smul.u32 128, %s152
        %p154 = scmp.lt.s32.totalorder %s149, 37
        %s155 = scalar_select %p154, %s149, 37
        %s156 = smul.addr %s155, 8
        %s157 = scalar_lea.vmem %s0, %s156
        %s158 = smul.u32 16, %s16
        %s159 = ssub.s32 38, %s158
        %p160 = scmp.lt.s32.totalorder %s159, 16
        %s161 = scalar_select %p160, %s159, 16
        %s162 = smul.u32 128, %s161
        %v163 = vld [vmem:[%s157] sm:$0xff]
        %v164 = vld [vmem:[%s157 + $0x8] sm:$0xff]
        %v165 = vld [vmem:[%s157 + $0x10] sm:$0xff]
        %v166 = vld [vmem:[%s157 + $0x18] sm:$0xff]
        %v167 = vld [vmem:[%s157 + $0x20] sm:$0xff]
        %v168 = vld [vmem:[%s157 + $0x28] sm:$0xff]
        %v169 = vld [vmem:[%s157 + $0x30] sm:$0xff]
        %v170 = vld [vmem:[%s157 + $0x38] sm:$0xff]
        %v171 = vld [vmem:[%s157 + $0x40] sm:$0xff]
        %v172 = vld [vmem:[%s157 + $0x48] sm:$0xff]
        %v173 = vld [vmem:[%s157 + $0x50] sm:$0xff]
        %v174 = vld [vmem:[%s157 + $0x58] sm:$0xff]
        %v175 = vld [vmem:[%s157 + $0x60] sm:$0xff]
        %v176 = vld [vmem:[%s157 + $0x68] sm:$0xff]
        %v177 = vld [vmem:[%s157 + $0x70] sm:$0xff]
        %v178 = vld [vmem:[%s157 + $0x78] sm:$0xff]
        %v179 = vld [vmem:[%s1] sm:$0xff]
        %v180 = vld [vmem:[%s1 + $0x8] sm:$0xff]
        %182 = vset.pattern.permute.xlu0 5
        %183 = vperm.xlu0 %182, %v179
        %v184 = vpop.permute.xlu0 %183
        %187 = vset.pattern.permute.xlu0 5
        %188 = vperm.xlu0 %187, %v180
        %v189 = vpop.permute.xlu0 %188
        %vm191 = vcmask 39936
        %v192 = vsel %vm191, %v179, 0
        %v194 = vsel %vm191, %v180, 0
        %v197 = vsel %vm191, %v163, 0
        %v200 = vsel %vm191, %v164, 0
        %v203 = vsel %vm191, %v165, 0
        %v206 = vsel %vm191, %v166, 0
        %v209 = vsel %vm191, %v167, 0
        %v212 = vsel %vm191, %v168, 0
        %v215 = vsel %vm191, %v169, 0
        %v218 = vsel %vm191, %v170, 0
        %v221 = vsel %vm191, %v171, 0
        %v224 = vsel %vm191, %v172, 0
        %v227 = vsel %vm191, %v173, 0
        %v230 = vsel %vm191, %v174, 0
        %v233 = vsel %vm191, %v175, 0
        %v236 = vsel %vm191, %v176, 0
        %v239 = vsel %vm191, %v177, 0
        %v242 = vsel %vm191, %v178, 0
        %244 = vmatprep.subr.mxu0 0.0
        %v245 = vand.u32 %v242, 4294901760
        %246 = vmatpush1.xpose.msra.mxu0 %v245
        %247 = vmatprep.subr.mxu0 0.0
        %v248 = vand.u32 %v239, 4294901760
        %249 = vmatpush1.xpose.msra.mxu0 %v248
        %250 = vmatprep.subr.mxu0 0.0
        %v251 = vand.u32 %v236, 4294901760
        %252 = vmatpush1.xpose.msra.mxu0 %v251
        %253 = vmatprep.subr.mxu0 0.0
        %v254 = vand.u32 %v233, 4294901760
        %255 = vmatpush1.xpose.msra.mxu0 %v254
        %256 = vmatprep.subr.mxu0 0.0
        %v257 = vand.u32 %v230, 4294901760
        %258 = vmatpush1.xpose.msra.mxu0 %v257
        %259 = vmatprep.subr.mxu0 0.0
        %v260 = vand.u32 %v227, 4294901760
        %261 = vmatpush1.xpose.msra.mxu0 %v260
        %262 = vmatprep.subr.mxu0 0.0
        %v263 = vand.u32 %v224, 4294901760
        %264 = vmatpush1.xpose.msra.mxu0 %v263
        %265 = vmatprep.subr.mxu0 0.0
        %v266 = vand.u32 %v221, 4294901760
        %267 = vmatpush1.xpose.msra.mxu0 %v266
        %268 = vmatprep.subr.mxu0 0.0
        %v269 = vand.u32 %v218, 4294901760
        %270 = vmatpush1.xpose.msra.mxu0 %v269
        %271 = vmatprep.subr.mxu0 0.0
        %v272 = vand.u32 %v215, 4294901760
        %273 = vmatpush1.xpose.msra.mxu0 %v272
        %274 = vmatprep.subr.mxu0 0.0
        %v275 = vand.u32 %v212, 4294901760
        %276 = vmatpush1.xpose.msra.mxu0 %v275
        %277 = vmatprep.subr.mxu0 0.0
        %v278 = vand.u32 %v209, 4294901760
        %279 = vmatpush1.xpose.msra.mxu0 %v278
        %280 = vmatprep.subr.mxu0 0.0
        %v281 = vand.u32 %v206, 4294901760
        %282 = vmatpush1.xpose.msra.mxu0 %v281
        %283 = vmatprep.subr.mxu0 0.0
        %v284 = vand.u32 %v203, 4294901760
        %285 = vmatpush1.xpose.msra.mxu0 %v284
        %286 = vmatprep.subr.mxu0 0.0
        %v287 = vand.u32 %v200, 4294901760
        %288 = vmatpush1.xpose.msra.mxu0 %v287
        %289 = vmatprep.subr.mxu0 0.0
        %v290 = vand.u32 %v197, 4294901760
        %291 = vmatpush1.xpose.msra.mxu0 %v290
        %292 = vmatprep.subr.mxu0 0.0
        %293 = vmatpush2.xpose.msra.mxu0 0.0
        %294 = vmatprep.subr.mxu0 0.0
        %295 = vmatpush2.xpose.msra.mxu0 0.0
        %296 = vmatprep.subr.mxu0 0.0
        %297 = vmatpush2.xpose.msra.mxu0 0.0
        %298 = vmatprep.subr.mxu0 0.0
        %299 = vmatpush2.xpose.msra.mxu0 0.0
        %300 = vmatprep.subr.mxu0 0.0
        %301 = vmatpush2.xpose.msra.mxu0 0.0
        %302 = vmatprep.subr.mxu0 0.0
        %303 = vmatpush2.xpose.msra.mxu0 0.0
        %304 = vmatprep.subr.mxu0 0.0
        %305 = vmatpush2.xpose.msra.mxu0 0.0
        %306 = vmatprep.subr.mxu0 0.0
        %307 = vmatpush2.xpose.msra.mxu0 0.0
        %308 = vmatprep.subr.mxu0 0.0
        %309 = vmatpush2.xpose.msra.mxu0 0.0
        %310 = vmatprep.subr.mxu0 0.0
        %311 = vmatpush2.xpose.msra.mxu0 0.0
        %312 = vmatprep.subr.mxu0 0.0
        %313 = vmatpush2.xpose.msra.mxu0 0.0
        %314 = vmatprep.subr.mxu0 0.0
        %315 = vmatpush2.xpose.msra.mxu0 0.0
        %316 = vmatprep.subr.mxu0 0.0
        %317 = vmatpush2.xpose.msra.mxu0 0.0
        %318 = vmatprep.subr.mxu0 0.0
        %319 = vmatpush2.xpose.msra.mxu0 0.0
        %320 = vmatprep.subr.mxu0 0.0
        %321 = vmatpush2.xpose.msra.mxu0 0.0
        %322 = vmatprep.subr.mxu0 0.0
        %323 = vmatpush2.xpose.msra.mxu0 0.0
        %324 = vmatprep.mubr.f32.mxu0 0.0
        %v325 = vand.u32 %v192, 4294901760
        %v326 = vsub.f32 %v192, %v325
        %v327 = vand.u32 %v326, 4294901760
        %v328 = vsub.f32 %v326, %v327
        %v329 = vand.u32 %v328, 4294901760
        %330 = vmatmul.mubr.f32.gmra.mxu0 %v329
        %v331 = vpop.f32.mrf.mxu0
        %v332 = vadd.f32 %v184, %v331
        %v333 = vpop.f32.mrf.mxu0
        %334 = vmatprep.mubr.f32.mxu0 0.0
        %v335 = vand.u32 %v194, 4294901760
        %v336 = vsub.f32 %v194, %v335
        %v337 = vand.u32 %v336, 4294901760
        %v338 = vsub.f32 %v336, %v337
        %v339 = vand.u32 %v338, 4294901760
        %340 = vmatmul.mubr.f32.gmra.mxu0 %v339
        %v341 = vpop.f32.mrf.mxu0
        %v342 = vadd.f32 %v189, %v341
        %v343 = vpop.f32.mrf.mxu0
        %344 = vdwg.mxu0
        %345 = vmatprep.subr.mxu0 0.0
        %v346 = vand.u32 %v242, 4294901760
        %v347 = vsub.f32 %v242, %v346
        %v348 = vand.u32 %v347, 4294901760
        %v349 = vsub.f32 %v347, %v348
        %v350 = vand.u32 %v349, 4294901760
        %351 = vmatpush1.xpose.msra.mxu0 %v350
        %352 = vmatprep.subr.mxu0 0.0
        %v353 = vand.u32 %v239, 4294901760
        %v354 = vsub.f32 %v239, %v353
        %v355 = vand.u32 %v354, 4294901760
        %v356 = vsub.f32 %v354, %v355
        %v357 = vand.u32 %v356, 4294901760
        %358 = vmatpush1.xpose.msra.mxu0 %v357
        %359 = vmatprep.subr.mxu0 0.0
        %v360 = vand.u32 %v236, 4294901760
        %v361 = vsub.f32 %v236, %v360
        %v362 = vand.u32 %v361, 4294901760
        %v363 = vsub.f32 %v361, %v362
        %v364 = vand.u32 %v363, 4294901760
        %365 = vmatpush1.xpose.msra.mxu0 %v364
        %366 = vmatprep.subr.mxu0 0.0
        %v367 = vand.u32 %v233, 4294901760
        %v368 = vsub.f32 %v233, %v367
        %v369 = vand.u32 %v368, 4294901760
        %v370 = vsub.f32 %v368, %v369
        %v371 = vand.u32 %v370, 4294901760
        %372 = vmatpush1.xpose.msra.mxu0 %v371
        %373 = vmatprep.subr.mxu0 0.0
        %v374 = vand.u32 %v230, 4294901760
        %v375 = vsub.f32 %v230, %v374
        %v376 = vand.u32 %v375, 4294901760
        %v377 = vsub.f32 %v375, %v376
        %v378 = vand.u32 %v377, 4294901760
        %379 = vmatpush1.xpose.msra.mxu0 %v378
        %380 = vmatprep.subr.mxu0 0.0
        %v381 = vand.u32 %v227, 4294901760
        %v382 = vsub.f32 %v227, %v381
        %v383 = vand.u32 %v382, 4294901760
        %v384 = vsub.f32 %v382, %v383
        %v385 = vand.u32 %v384, 4294901760
        %386 = vmatpush1.xpose.msra.mxu0 %v385
        %387 = vmatprep.subr.mxu0 0.0
        %v388 = vand.u32 %v224, 4294901760
        %v389 = vsub.f32 %v224, %v388
        %v390 = vand.u32 %v389, 4294901760
        %v391 = vsub.f32 %v389, %v390
        %v392 = vand.u32 %v391, 4294901760
        %393 = vmatpush1.xpose.msra.mxu0 %v392
        %394 = vmatprep.subr.mxu0 0.0
        %v395 = vand.u32 %v221, 4294901760
        %v396 = vsub.f32 %v221, %v395
        %v397 = vand.u32 %v396, 4294901760
        %v398 = vsub.f32 %v396, %v397
        %v399 = vand.u32 %v398, 4294901760
        %400 = vmatpush1.xpose.msra.mxu0 %v399
        %401 = vmatprep.subr.mxu0 0.0
        %v402 = vand.u32 %v218, 4294901760
        %v403 = vsub.f32 %v218, %v402
        %v404 = vand.u32 %v403, 4294901760
        %v405 = vsub.f32 %v403, %v404
        %v406 = vand.u32 %v405, 4294901760
        %407 = vmatpush1.xpose.msra.mxu0 %v406
        %408 = vmatprep.subr.mxu0 0.0
        %v409 = vand.u32 %v215, 4294901760
        %v410 = vsub.f32 %v215, %v409
        %v411 = vand.u32 %v410, 4294901760
        %v412 = vsub.f32 %v410, %v411
        %v413 = vand.u32 %v412, 4294901760
        %414 = vmatpush1.xpose.msra.mxu0 %v413
        %415 = vmatprep.subr.mxu0 0.0
        %v416 = vand.u32 %v212, 4294901760
        %v417 = vsub.f32 %v212, %v416
        %v418 = vand.u32 %v417, 4294901760
        %v419 = vsub.f32 %v417, %v418
        %v420 = vand.u32 %v419, 4294901760
        %421 = vmatpush1.xpose.msra.mxu0 %v420
        %422 = vmatprep.subr.mxu0 0.0
        %v423 = vand.u32 %v209, 4294901760
        %v424 = vsub.f32 %v209, %v423
        %v425 = vand.u32 %v424, 4294901760
        %v426 = vsub.f32 %v424, %v425
        %v427 = vand.u32 %v426, 4294901760
        %428 = vmatpush1.xpose.msra.mxu0 %v427
        %429 = vmatprep.subr.mxu0 0.0
        %v430 = vand.u32 %v206, 4294901760
        %v431 = vsub.f32 %v206, %v430
        %v432 = vand.u32 %v431, 4294901760
        %v433 = vsub.f32 %v431, %v432
        %v434 = vand.u32 %v433, 4294901760
        %435 = vmatpush1.xpose.msra.mxu0 %v434
        %436 = vmatprep.subr.mxu0 0.0
        %v437 = vand.u32 %v203, 4294901760
        %v438 = vsub.f32 %v203, %v437
        %v439 = vand.u32 %v438, 4294901760
        %v440 = vsub.f32 %v438, %v439
        %v441 = vand.u32 %v440, 4294901760
        %442 = vmatpush1.xpose.msra.mxu0 %v441
        %443 = vmatprep.subr.mxu0 0.0
        %v444 = vand.u32 %v200, 4294901760
        %v445 = vsub.f32 %v200, %v444
        %v446 = vand.u32 %v445, 4294901760
        %v447 = vsub.f32 %v445, %v446
        %v448 = vand.u32 %v447, 4294901760
        %449 = vmatpush1.xpose.msra.mxu0 %v448
        %450 = vmatprep.subr.mxu0 0.0
        %v451 = vand.u32 %v197, 4294901760
        %v452 = vsub.f32 %v197, %v451
        %v453 = vand.u32 %v452, 4294901760
        %v454 = vsub.f32 %v452, %v453
        %v455 = vand.u32 %v454, 4294901760
        %456 = vmatpush1.xpose.msra.mxu0 %v455
        %457 = vmatprep.subr.mxu0 0.0
        %458 = vmatpush2.xpose.msra.mxu0 0.0
        %459 = vmatprep.subr.mxu0 0.0
        %460 = vmatpush2.xpose.msra.mxu0 0.0
        %461 = vmatprep.subr.mxu0 0.0
        %462 = vmatpush2.xpose.msra.mxu0 0.0
        %463 = vmatprep.subr.mxu0 0.0
        %464 = vmatpush2.xpose.msra.mxu0 0.0
        %465 = vmatprep.subr.mxu0 0.0
        %466 = vmatpush2.xpose.msra.mxu0 0.0
        %467 = vmatprep.subr.mxu0 0.0
        %468 = vmatpush2.xpose.msra.mxu0 0.0
        %469 = vmatprep.subr.mxu0 0.0
        %470 = vmatpush2.xpose.msra.mxu0 0.0
        %471 = vmatprep.subr.mxu0 0.0
        %472 = vmatpush2.xpose.msra.mxu0 0.0
        %473 = vmatprep.subr.mxu0 0.0
        %474 = vmatpush2.xpose.msra.mxu0 0.0
        %475 = vmatprep.subr.mxu0 0.0
        %476 = vmatpush2.xpose.msra.mxu0 0.0
        %477 = vmatprep.subr.mxu0 0.0
        %478 = vmatpush2.xpose.msra.mxu0 0.0
        %479 = vmatprep.subr.mxu0 0.0
        %480 = vmatpush2.xpose.msra.mxu0 0.0
        %481 = vmatprep.subr.mxu0 0.0
        %482 = vmatpush2.xpose.msra.mxu0 0.0
        %483 = vmatprep.subr.mxu0 0.0
        %484 = vmatpush2.xpose.msra.mxu0 0.0
        %485 = vmatprep.subr.mxu0 0.0
        %486 = vmatpush2.xpose.msra.mxu0 0.0
        %487 = vmatprep.subr.mxu0 0.0
        %488 = vmatpush2.xpose.msra.mxu0 0.0
        %489 = vmatprep.mubr.f32.mxu0 0.0
        %v490 = vand.u32 %v192, 4294901760
        %491 = vmatmul.mubr.f32.gmra.mxu0 %v490
        %v492 = vpop.f32.mrf.mxu0
        %v493 = vadd.f32 %v332, %v492
        %v494 = vpop.f32.mrf.mxu0
        %495 = vmatprep.mubr.f32.mxu0 0.0
        %v496 = vand.u32 %v194, 4294901760
        %497 = vmatmul.mubr.f32.gmra.mxu0 %v496
        %v498 = vpop.f32.mrf.mxu0
        %v499 = vadd.f32 %v342, %v498
        %v500 = vpop.f32.mrf.mxu0
        %501 = vdwg.mxu0
        %502 = vmatprep.subr.mxu0 0.0
        %v503 = vand.u32 %v242, 4294901760
        %v504 = vsub.f32 %v242, %v503
        %505 = vmatpush1.xpose.msra.mxu0 %v504
        %506 = vmatprep.subr.mxu0 0.0
        %v507 = vand.u32 %v239, 4294901760
        %v508 = vsub.f32 %v239, %v507
        %509 = vmatpush1.xpose.msra.mxu0 %v508
        %510 = vmatprep.subr.mxu0 0.0
        %v511 = vand.u32 %v236, 4294901760
        %v512 = vsub.f32 %v236, %v511
        %513 = vmatpush1.xpose.msra.mxu0 %v512
        %514 = vmatprep.subr.mxu0 0.0
        %v515 = vand.u32 %v233, 4294901760
        %v516 = vsub.f32 %v233, %v515
        %517 = vmatpush1.xpose.msra.mxu0 %v516
        %518 = vmatprep.subr.mxu0 0.0
        %v519 = vand.u32 %v230, 4294901760
        %v520 = vsub.f32 %v230, %v519
        %521 = vmatpush1.xpose.msra.mxu0 %v520
        %522 = vmatprep.subr.mxu0 0.0
        %v523 = vand.u32 %v227, 4294901760
        %v524 = vsub.f32 %v227, %v523
        %525 = vmatpush1.xpose.msra.mxu0 %v524
        %526 = vmatprep.subr.mxu0 0.0
        %v527 = vand.u32 %v224, 4294901760
        %v528 = vsub.f32 %v224, %v527
        %529 = vmatpush1.xpose.msra.mxu0 %v528
        %530 = vmatprep.subr.mxu0 0.0
        %v531 = vand.u32 %v221, 4294901760
        %v532 = vsub.f32 %v221, %v531
        %533 = vmatpush1.xpose.msra.mxu0 %v532
        %534 = vmatprep.subr.mxu0 0.0
        %v535 = vand.u32 %v218, 4294901760
        %v536 = vsub.f32 %v218, %v535
        %537 = vmatpush1.xpose.msra.mxu0 %v536
        %538 = vmatprep.subr.mxu0 0.0
        %v539 = vand.u32 %v215, 4294901760
        %v540 = vsub.f32 %v215, %v539
        %541 = vmatpush1.xpose.msra.mxu0 %v540
        %542 = vmatprep.subr.mxu0 0.0
        %v543 = vand.u32 %v212, 4294901760
        %v544 = vsub.f32 %v212, %v543
        %545 = vmatpush1.xpose.msra.mxu0 %v544
        %546 = vmatprep.subr.mxu0 0.0
        %v547 = vand.u32 %v209, 4294901760
        %v548 = vsub.f32 %v209, %v547
        %549 = vmatpush1.xpose.msra.mxu0 %v548
        %550 = vmatprep.subr.mxu0 0.0
        %v551 = vand.u32 %v206, 4294901760
        %v552 = vsub.f32 %v206, %v551
        %553 = vmatpush1.xpose.msra.mxu0 %v552
        %554 = vmatprep.subr.mxu0 0.0
        %v555 = vand.u32 %v203, 4294901760
        %v556 = vsub.f32 %v203, %v555
        %557 = vmatpush1.xpose.msra.mxu0 %v556
        %558 = vmatprep.subr.mxu0 0.0
        %v559 = vand.u32 %v200, 4294901760
        %v560 = vsub.f32 %v200, %v559
        %561 = vmatpush1.xpose.msra.mxu0 %v560
        %562 = vmatprep.subr.mxu0 0.0
        %v563 = vand.u32 %v197, 4294901760
        %v564 = vsub.f32 %v197, %v563
        %565 = vmatpush1.xpose.msra.mxu0 %v564
        %566 = vmatprep.subr.mxu0 0.0
        %567 = vmatpush2.xpose.msra.mxu0 0.0
        %568 = vmatprep.subr.mxu0 0.0
        %569 = vmatpush2.xpose.msra.mxu0 0.0
        %570 = vmatprep.subr.mxu0 0.0
        %571 = vmatpush2.xpose.msra.mxu0 0.0
        %572 = vmatprep.subr.mxu0 0.0
        %573 = vmatpush2.xpose.msra.mxu0 0.0
        %574 = vmatprep.subr.mxu0 0.0
        %575 = vmatpush2.xpose.msra.mxu0 0.0
        %576 = vmatprep.subr.mxu0 0.0
        %577 = vmatpush2.xpose.msra.mxu0 0.0
        %578 = vmatprep.subr.mxu0 0.0
        %579 = vmatpush2.xpose.msra.mxu0 0.0
        %580 = vmatprep.subr.mxu0 0.0
        %581 = vmatpush2.xpose.msra.mxu0 0.0
        %582 = vmatprep.subr.mxu0 0.0
        %583 = vmatpush2.xpose.msra.mxu0 0.0
        %584 = vmatprep.subr.mxu0 0.0
        %585 = vmatpush2.xpose.msra.mxu0 0.0
        %586 = vmatprep.subr.mxu0 0.0
        %587 = vmatpush2.xpose.msra.mxu0 0.0
        %588 = vmatprep.subr.mxu0 0.0
        %589 = vmatpush2.xpose.msra.mxu0 0.0
        %590 = vmatprep.subr.mxu0 0.0
        %591 = vmatpush2.xpose.msra.mxu0 0.0
        %592 = vmatprep.subr.mxu0 0.0
        %593 = vmatpush2.xpose.msra.mxu0 0.0
        %594 = vmatprep.subr.mxu0 0.0
        %595 = vmatpush2.xpose.msra.mxu0 0.0
        %596 = vmatprep.subr.mxu0 0.0
        %597 = vmatpush2.xpose.msra.mxu0 0.0
        %598 = vmatprep.mubr.f32.mxu0 0.0
        %v599 = vand.u32 %v192, 4294901760
        %v600 = vsub.f32 %v192, %v599
        %601 = vmatmul.mubr.f32.gmra.mxu0 %v600
        %v602 = vpop.f32.mrf.mxu0
        %v603 = vadd.f32 %v493, %v602
        %v604 = vpop.f32.mrf.mxu0
        %605 = vmatprep.mubr.f32.mxu0 0.0
        %v606 = vand.u32 %v194, 4294901760
        %v607 = vsub.f32 %v194, %v606
        %608 = vmatmul.mubr.f32.gmra.mxu0 %v607
        %v609 = vpop.f32.mrf.mxu0
        %v610 = vadd.f32 %v499, %v609
        %v611 = vpop.f32.mrf.mxu0
        %612 = vdwg.mxu0
        %613 = vmatprep.subr.mxu0 0.0
        %v614 = vand.u32 %v242, 4294901760
        %615 = vmatpush1.xpose.msra.mxu0 %v614
        %616 = vmatprep.subr.mxu0 0.0
        %v617 = vand.u32 %v239, 4294901760
        %618 = vmatpush1.xpose.msra.mxu0 %v617
        %619 = vmatprep.subr.mxu0 0.0
        %v620 = vand.u32 %v236, 4294901760
        %621 = vmatpush1.xpose.msra.mxu0 %v620
        %622 = vmatprep.subr.mxu0 0.0
        %v623 = vand.u32 %v233, 4294901760
        %624 = vmatpush1.xpose.msra.mxu0 %v623
        %625 = vmatprep.subr.mxu0 0.0
        %v626 = vand.u32 %v230, 4294901760
        %627 = vmatpush1.xpose.msra.mxu0 %v626
        %628 = vmatprep.subr.mxu0 0.0
        %v629 = vand.u32 %v227, 4294901760
        %630 = vmatpush1.xpose.msra.mxu0 %v629
        %631 = vmatprep.subr.mxu0 0.0
        %v632 = vand.u32 %v224, 4294901760
        %633 = vmatpush1.xpose.msra.mxu0 %v632
        %634 = vmatprep.subr.mxu0 0.0
        %v635 = vand.u32 %v221, 4294901760
        %636 = vmatpush1.xpose.msra.mxu0 %v635
        %637 = vmatprep.subr.mxu0 0.0
        %v638 = vand.u32 %v218, 4294901760
        %639 = vmatpush1.xpose.msra.mxu0 %v638
        %640 = vmatprep.subr.mxu0 0.0
        %v641 = vand.u32 %v215, 4294901760
        %642 = vmatpush1.xpose.msra.mxu0 %v641
        %643 = vmatprep.subr.mxu0 0.0
        %v644 = vand.u32 %v212, 4294901760
        %645 = vmatpush1.xpose.msra.mxu0 %v644
        %646 = vmatprep.subr.mxu0 0.0
        %v647 = vand.u32 %v209, 4294901760
        %648 = vmatpush1.xpose.msra.mxu0 %v647
        %649 = vmatprep.subr.mxu0 0.0
        %v650 = vand.u32 %v206, 4294901760
        %651 = vmatpush1.xpose.msra.mxu0 %v650
        %652 = vmatprep.subr.mxu0 0.0
        %v653 = vand.u32 %v203, 4294901760
        %654 = vmatpush1.xpose.msra.mxu0 %v653
        %655 = vmatprep.subr.mxu0 0.0
        %v656 = vand.u32 %v200, 4294901760
        %657 = vmatpush1.xpose.msra.mxu0 %v656
        %658 = vmatprep.subr.mxu0 0.0
        %v659 = vand.u32 %v197, 4294901760
        %660 = vmatpush1.xpose.msra.mxu0 %v659
        %661 = vmatprep.subr.mxu0 0.0
        %662 = vmatpush2.xpose.msra.mxu0 0.0
        %663 = vmatprep.subr.mxu0 0.0
        %664 = vmatpush2.xpose.msra.mxu0 0.0
        %665 = vmatprep.subr.mxu0 0.0
        %666 = vmatpush2.xpose.msra.mxu0 0.0
        %667 = vmatprep.subr.mxu0 0.0
        %668 = vmatpush2.xpose.msra.mxu0 0.0
        %669 = vmatprep.subr.mxu0 0.0
        %670 = vmatpush2.xpose.msra.mxu0 0.0
        %671 = vmatprep.subr.mxu0 0.0
        %672 = vmatpush2.xpose.msra.mxu0 0.0
        %673 = vmatprep.subr.mxu0 0.0
        %674 = vmatpush2.xpose.msra.mxu0 0.0
        %675 = vmatprep.subr.mxu0 0.0
        %676 = vmatpush2.xpose.msra.mxu0 0.0
        %677 = vmatprep.subr.mxu0 0.0
        %678 = vmatpush2.xpose.msra.mxu0 0.0
        %679 = vmatprep.subr.mxu0 0.0
        %680 = vmatpush2.xpose.msra.mxu0 0.0
        %681 = vmatprep.subr.mxu0 0.0
        %682 = vmatpush2.xpose.msra.mxu0 0.0
        %683 = vmatprep.subr.mxu0 0.0
        %684 = vmatpush2.xpose.msra.mxu0 0.0
        %685 = vmatprep.subr.mxu0 0.0
        %686 = vmatpush2.xpose.msra.mxu0 0.0
        %687 = vmatprep.subr.mxu0 0.0
        %688 = vmatpush2.xpose.msra.mxu0 0.0
        %689 = vmatprep.subr.mxu0 0.0
        %690 = vmatpush2.xpose.msra.mxu0 0.0
        %691 = vmatprep.subr.mxu0 0.0
        %692 = vmatpush2.xpose.msra.mxu0 0.0
        %693 = vmatprep.mubr.f32.mxu0 0.0
        %v694 = vand.u32 %v192, 4294901760
        %v695 = vsub.f32 %v192, %v694
        %v696 = vand.u32 %v695, 4294901760
        %697 = vmatmul.mubr.f32.gmra.mxu0 %v696
        %v698 = vpop.f32.mrf.mxu0
        %v699 = vadd.f32 %v603, %v698
        %v700 = vpop.f32.mrf.mxu0
        %701 = vmatprep.mubr.f32.mxu0 0.0
        %v702 = vand.u32 %v194, 4294901760
        %v703 = vsub.f32 %v194, %v702
        %v704 = vand.u32 %v703, 4294901760
        %705 = vmatmul.mubr.f32.gmra.mxu0 %v704
        %v706 = vpop.f32.mrf.mxu0
        %v707 = vadd.f32 %v610, %v706
        %v708 = vpop.f32.mrf.mxu0
        %709 = vdwg.mxu0
        %710 = vmatprep.subr.mxu0 0.0
        %v711 = vand.u32 %v242, 4294901760
        %v712 = vsub.f32 %v242, %v711
        %v713 = vand.u32 %v712, 4294901760
        %714 = vmatpush1.xpose.msra.mxu0 %v713
        %715 = vmatprep.subr.mxu0 0.0
        %v716 = vand.u32 %v239, 4294901760
        %v717 = vsub.f32 %v239, %v716
        %v718 = vand.u32 %v717, 4294901760
        %719 = vmatpush1.xpose.msra.mxu0 %v718
        %720 = vmatprep.subr.mxu0 0.0
        %v721 = vand.u32 %v236, 4294901760
        %v722 = vsub.f32 %v236, %v721
        %v723 = vand.u32 %v722, 4294901760
        %724 = vmatpush1.xpose.msra.mxu0 %v723
        %725 = vmatprep.subr.mxu0 0.0
        %v726 = vand.u32 %v233, 4294901760
        %v727 = vsub.f32 %v233, %v726
        %v728 = vand.u32 %v727, 4294901760
        %729 = vmatpush1.xpose.msra.mxu0 %v728
        %730 = vmatprep.subr.mxu0 0.0
        %v731 = vand.u32 %v230, 4294901760
        %v732 = vsub.f32 %v230, %v731
        %v733 = vand.u32 %v732, 4294901760
        %734 = vmatpush1.xpose.msra.mxu0 %v733
        %735 = vmatprep.subr.mxu0 0.0
        %v736 = vand.u32 %v227, 4294901760
        %v737 = vsub.f32 %v227, %v736
        %v738 = vand.u32 %v737, 4294901760
        %739 = vmatpush1.xpose.msra.mxu0 %v738
        %740 = vmatprep.subr.mxu0 0.0
        %v741 = vand.u32 %v224, 4294901760
        %v742 = vsub.f32 %v224, %v741
        %v743 = vand.u32 %v742, 4294901760
        %744 = vmatpush1.xpose.msra.mxu0 %v743
        %745 = vmatprep.subr.mxu0 0.0
        %v746 = vand.u32 %v221, 4294901760
        %v747 = vsub.f32 %v221, %v746
        %v748 = vand.u32 %v747, 4294901760
        %749 = vmatpush1.xpose.msra.mxu0 %v748
        %750 = vmatprep.subr.mxu0 0.0
        %v751 = vand.u32 %v218, 4294901760
        %v752 = vsub.f32 %v218, %v751
        %v753 = vand.u32 %v752, 4294901760
        %754 = vmatpush1.xpose.msra.mxu0 %v753
        %755 = vmatprep.subr.mxu0 0.0
        %v756 = vand.u32 %v215, 4294901760
        %v757 = vsub.f32 %v215, %v756
        %v758 = vand.u32 %v757, 4294901760
        %759 = vmatpush1.xpose.msra.mxu0 %v758
        %760 = vmatprep.subr.mxu0 0.0
        %v761 = vand.u32 %v212, 4294901760
        %v762 = vsub.f32 %v212, %v761
        %v763 = vand.u32 %v762, 4294901760
        %764 = vmatpush1.xpose.msra.mxu0 %v763
        %765 = vmatprep.subr.mxu0 0.0
        %v766 = vand.u32 %v209, 4294901760
        %v767 = vsub.f32 %v209, %v766
        %v768 = vand.u32 %v767, 4294901760
        %769 = vmatpush1.xpose.msra.mxu0 %v768
        %770 = vmatprep.subr.mxu0 0.0
        %v771 = vand.u32 %v206, 4294901760
        %v772 = vsub.f32 %v206, %v771
        %v773 = vand.u32 %v772, 4294901760
        %774 = vmatpush1.xpose.msra.mxu0 %v773
        %775 = vmatprep.subr.mxu0 0.0
        %v776 = vand.u32 %v203, 4294901760
        %v777 = vsub.f32 %v203, %v776
        %v778 = vand.u32 %v777, 4294901760
        %779 = vmatpush1.xpose.msra.mxu0 %v778
        %780 = vmatprep.subr.mxu0 0.0
        %v781 = vand.u32 %v200, 4294901760
        %v782 = vsub.f32 %v200, %v781
        %v783 = vand.u32 %v782, 4294901760
        %784 = vmatpush1.xpose.msra.mxu0 %v783
        %785 = vmatprep.subr.mxu0 0.0
        %v786 = vand.u32 %v197, 4294901760
        %v787 = vsub.f32 %v197, %v786
        %v788 = vand.u32 %v787, 4294901760
        %789 = vmatpush1.xpose.msra.mxu0 %v788
        %790 = vmatprep.subr.mxu0 0.0
        %791 = vmatpush2.xpose.msra.mxu0 0.0
        %792 = vmatprep.subr.mxu0 0.0
        %793 = vmatpush2.xpose.msra.mxu0 0.0
        %794 = vmatprep.subr.mxu0 0.0
        %795 = vmatpush2.xpose.msra.mxu0 0.0
        %796 = vmatprep.subr.mxu0 0.0
        %797 = vmatpush2.xpose.msra.mxu0 0.0
        %798 = vmatprep.subr.mxu0 0.0
        %799 = vmatpush2.xpose.msra.mxu0 0.0
        %800 = vmatprep.subr.mxu0 0.0
        %801 = vmatpush2.xpose.msra.mxu0 0.0
        %802 = vmatprep.subr.mxu0 0.0
        %803 = vmatpush2.xpose.msra.mxu0 0.0
        %804 = vmatprep.subr.mxu0 0.0
        %805 = vmatpush2.xpose.msra.mxu0 0.0
        %806 = vmatprep.subr.mxu0 0.0
        %807 = vmatpush2.xpose.msra.mxu0 0.0
        %808 = vmatprep.subr.mxu0 0.0
        %809 = vmatpush2.xpose.msra.mxu0 0.0
        %810 = vmatprep.subr.mxu0 0.0
        %811 = vmatpush2.xpose.msra.mxu0 0.0
        %812 = vmatprep.subr.mxu0 0.0
        %813 = vmatpush2.xpose.msra.mxu0 0.0
        %814 = vmatprep.subr.mxu0 0.0
        %815 = vmatpush2.xpose.msra.mxu0 0.0
        %816 = vmatprep.subr.mxu0 0.0
        %817 = vmatpush2.xpose.msra.mxu0 0.0
        %818 = vmatprep.subr.mxu0 0.0
        %819 = vmatpush2.xpose.msra.mxu0 0.0
        %820 = vmatprep.subr.mxu0 0.0
        %821 = vmatpush2.xpose.msra.mxu0 0.0
        %822 = vmatprep.mubr.f32.mxu0 0.0
        %v823 = vand.u32 %v192, 4294901760
        %824 = vmatmul.mubr.f32.gmra.mxu0 %v823
        %v825 = vpop.f32.mrf.mxu0
        %v826 = vadd.f32 %v699, %v825
        %v827 = vpop.f32.mrf.mxu0
        %828 = vmatprep.mubr.f32.mxu0 0.0
        %v829 = vand.u32 %v194, 4294901760
        %830 = vmatmul.mubr.f32.gmra.mxu0 %v829
        %v831 = vpop.f32.mrf.mxu0
        %v832 = vadd.f32 %v707, %v831
        %v833 = vpop.f32.mrf.mxu0
        %834 = vdwg.mxu0
        %835 = vmatprep.subr.mxu0 0.0
        %v836 = vand.u32 %v242, 4294901760
        %837 = vmatpush1.xpose.msra.mxu0 %v836
        %838 = vmatprep.subr.mxu0 0.0
        %v839 = vand.u32 %v239, 4294901760
        %840 = vmatpush1.xpose.msra.mxu0 %v839
        %841 = vmatprep.subr.mxu0 0.0
        %v842 = vand.u32 %v236, 4294901760
        %843 = vmatpush1.xpose.msra.mxu0 %v842
        %844 = vmatprep.subr.mxu0 0.0
        %v845 = vand.u32 %v233, 4294901760
        %846 = vmatpush1.xpose.msra.mxu0 %v845
        %847 = vmatprep.subr.mxu0 0.0
        %v848 = vand.u32 %v230, 4294901760
        %849 = vmatpush1.xpose.msra.mxu0 %v848
        %850 = vmatprep.subr.mxu0 0.0
        %v851 = vand.u32 %v227, 4294901760
        %852 = vmatpush1.xpose.msra.mxu0 %v851
        %853 = vmatprep.subr.mxu0 0.0
        %v854 = vand.u32 %v224, 4294901760
        %855 = vmatpush1.xpose.msra.mxu0 %v854
        %856 = vmatprep.subr.mxu0 0.0
        %v857 = vand.u32 %v221, 4294901760
        %858 = vmatpush1.xpose.msra.mxu0 %v857
        %859 = vmatprep.subr.mxu0 0.0
        %v860 = vand.u32 %v218, 4294901760
        %861 = vmatpush1.xpose.msra.mxu0 %v860
        %862 = vmatprep.subr.mxu0 0.0
        %v863 = vand.u32 %v215, 4294901760
        %864 = vmatpush1.xpose.msra.mxu0 %v863
        %865 = vmatprep.subr.mxu0 0.0
        %v866 = vand.u32 %v212, 4294901760
        %867 = vmatpush1.xpose.msra.mxu0 %v866
        %868 = vmatprep.subr.mxu0 0.0
        %v869 = vand.u32 %v209, 4294901760
        %870 = vmatpush1.xpose.msra.mxu0 %v869
        %871 = vmatprep.subr.mxu0 0.0
        %v872 = vand.u32 %v206, 4294901760
        %873 = vmatpush1.xpose.msra.mxu0 %v872
        %874 = vmatprep.subr.mxu0 0.0
        %v875 = vand.u32 %v203, 4294901760
        %876 = vmatpush1.xpose.msra.mxu0 %v875
        %877 = vmatprep.subr.mxu0 0.0
        %v878 = vand.u32 %v200, 4294901760
        %879 = vmatpush1.xpose.msra.mxu0 %v878
        %880 = vmatprep.subr.mxu0 0.0
        %v881 = vand.u32 %v197, 4294901760
        %882 = vmatpush1.xpose.msra.mxu0 %v881
        %883 = vmatprep.subr.mxu0 0.0
        %884 = vmatpush2.xpose.msra.mxu0 0.0
        %885 = vmatprep.subr.mxu0 0.0
        %886 = vmatpush2.xpose.msra.mxu0 0.0
        %887 = vmatprep.subr.mxu0 0.0
        %888 = vmatpush2.xpose.msra.mxu0 0.0
        %889 = vmatprep.subr.mxu0 0.0
        %890 = vmatpush2.xpose.msra.mxu0 0.0
        %891 = vmatprep.subr.mxu0 0.0
        %892 = vmatpush2.xpose.msra.mxu0 0.0
        %893 = vmatprep.subr.mxu0 0.0
        %894 = vmatpush2.xpose.msra.mxu0 0.0
        %895 = vmatprep.subr.mxu0 0.0
        %896 = vmatpush2.xpose.msra.mxu0 0.0
        %897 = vmatprep.subr.mxu0 0.0
        %898 = vmatpush2.xpose.msra.mxu0 0.0
        %899 = vmatprep.subr.mxu0 0.0
        %900 = vmatpush2.xpose.msra.mxu0 0.0
        %901 = vmatprep.subr.mxu0 0.0
        %902 = vmatpush2.xpose.msra.mxu0 0.0
        %903 = vmatprep.subr.mxu0 0.0
        %904 = vmatpush2.xpose.msra.mxu0 0.0
        %905 = vmatprep.subr.mxu0 0.0
        %906 = vmatpush2.xpose.msra.mxu0 0.0
        %907 = vmatprep.subr.mxu0 0.0
        %908 = vmatpush2.xpose.msra.mxu0 0.0
        %909 = vmatprep.subr.mxu0 0.0
        %910 = vmatpush2.xpose.msra.mxu0 0.0
        %911 = vmatprep.subr.mxu0 0.0
        %912 = vmatpush2.xpose.msra.mxu0 0.0
        %913 = vmatprep.subr.mxu0 0.0
        %914 = vmatpush2.xpose.msra.mxu0 0.0
        %915 = vmatprep.mubr.f32.mxu0 0.0
        %v916 = vand.u32 %v192, 4294901760
        %917 = vmatmul.mubr.f32.gmra.mxu0 %v916
        %v918 = vpop.f32.mrf.mxu0
        %v919 = vadd.f32 %v826, %v918
        %v920 = vpop.f32.mrf.mxu0
        %921 = vmatprep.mubr.f32.mxu0 0.0
        %v922 = vand.u32 %v194, 4294901760
        %923 = vmatmul.mubr.f32.gmra.mxu0 %v922
        %v924 = vpop.f32.mrf.mxu0
        %v925 = vadd.f32 %v832, %v924
        %v926 = vpop.f32.mrf.mxu0
        %927 = vdwg.mxu0
        %v928 = vmax.f32 %v919, 0.0
        %v929 = vmax.f32 %v925, 0.0
        %930 = vset.pattern.permute.xlu0 7
        %931 = vperm.xlu0 %930, %v179
        %v932 = vpop.permute.xlu0 %931
        %934 = vrot.lane.b32.xlu0 %v179, 122
        %v935 = vpop.permute.xlu0 %934
        %936 = vrot.lane.b32.xlu0 %v180, 122
        %v937 = vpop.permute.xlu0 %936
        %940 = vxpose.xlu0.b32.start [1/16] %v935, 128
        %941 = vxpose.xlu0.b32.cont [2/16] %v937, 128
        %942 = vxpose.xlu0.b32.cont [3/16] 0.0, 128
        %943 = vxpose.xlu0.b32.cont [4/16] 0.0, 128
        %944 = vxpose.xlu0.b32.cont [5/16] 0.0, 128
        %945 = vxpose.xlu0.b32.cont [6/16] 0.0, 128
        %946 = vxpose.xlu0.b32.cont [7/16] 0.0, 128
        %947 = vxpose.xlu0.b32.cont [8/16] 0.0, 128
        %948 = vxpose.xlu0.b32.cont [9/16] 0.0, 128
        %949 = vxpose.xlu0.b32.cont [10/16] 0.0, 128
        %950 = vxpose.xlu0.b32.cont [11/16] 0.0, 128
        %951 = vxpose.xlu0.b32.cont [12/16] 0.0, 128
        %952 = vxpose.xlu0.b32.cont [13/16] 0.0, 128
        %953 = vxpose.xlu0.b32.cont [14/16] 0.0, 128
        %954 = vxpose.xlu0.b32.cont [15/16] 0.0, 128
        %955 = vxpose.xlu0.b32.end [16/16] 0.0, 128
        %v956 = vpop.trf.xlu0
        %v957 = vpop.trf.xlu0
        %v958 = vpop.trf.xlu0
        %v959 = vpop.trf.xlu0
        %v960 = vpop.trf.xlu0
        %v961 = vpop.trf.xlu0
        %v962 = vpop.trf.xlu0
        %v963 = vpop.trf.xlu0
        %v964 = vpop.trf.xlu0
        %v965 = vpop.trf.xlu0
        %v966 = vpop.trf.xlu0
        %v967 = vpop.trf.xlu0
        %v968 = vpop.trf.xlu0
        %v969 = vpop.trf.xlu0
        %v970 = vpop.trf.xlu0
        %v971 = vpop.trf.xlu0
        %vm972 = vcmask 130048
        %v974 = vsel %vm972, %v956, 0
        %976 = vmatprep.subr.mxu0 0.0
        %977 = vmatpush1.msra.mxu0 0.0
        %978 = vmatprep.subr.mxu0 0.0
        %979 = vmatpush1.msra.mxu0 0.0
        %980 = vmatprep.subr.mxu0 0.0
        %981 = vmatpush1.msra.mxu0 0.0
        %982 = vmatprep.subr.mxu0 0.0
        %983 = vmatpush1.msra.mxu0 0.0
        %984 = vmatprep.subr.mxu0 0.0
        %985 = vmatpush1.msra.mxu0 0.0
        %986 = vmatprep.subr.mxu0 0.0
        %987 = vmatpush1.msra.mxu0 0.0
        %988 = vmatprep.subr.mxu0 0.0
        %989 = vmatpush1.msra.mxu0 0.0
        %990 = vmatprep.subr.mxu0 0.0
        %991 = vmatpush1.msra.mxu0 0.0
        %992 = vmatprep.subr.mxu0 0.0
        %993 = vmatpush1.msra.mxu0 0.0
        %994 = vmatprep.subr.mxu0 0.0
        %995 = vmatpush1.msra.mxu0 0.0
        %996 = vmatprep.subr.mxu0 0.0
        %997 = vmatpush1.msra.mxu0 0.0
        %998 = vmatprep.subr.mxu0 0.0
        %999 = vmatpush1.msra.mxu0 0.0
        %1000 = vmatprep.subr.mxu0 0.0
        %1001 = vmatpush1.msra.mxu0 0.0
        %1002 = vmatprep.subr.mxu0 0.0
        %1003 = vmatpush1.msra.mxu0 0.0
        %1004 = vmatprep.subr.mxu0 0.0
        %v1005 = vand.u32 %v929, 4294901760
        %1006 = vmatpush1.msra.mxu0 %v1005
        %1007 = vmatprep.subr.mxu0 0.0
        %v1008 = vand.u32 %v928, 4294901760
        %1009 = vmatpush1.msra.mxu0 %v1008
        %1010 = vmatprep.subr.mxu0 0.0
        %1011 = vmatpush2.msra.mxu0 0.0
        %1012 = vmatprep.subr.mxu0 0.0
        %1013 = vmatpush2.msra.mxu0 0.0
        %1014 = vmatprep.subr.mxu0 0.0
        %1015 = vmatpush2.msra.mxu0 0.0
        %1016 = vmatprep.subr.mxu0 0.0
        %1017 = vmatpush2.msra.mxu0 0.0
        %1018 = vmatprep.subr.mxu0 0.0
        %1019 = vmatpush2.msra.mxu0 0.0
        %1020 = vmatprep.subr.mxu0 0.0
        %1021 = vmatpush2.msra.mxu0 0.0
        %1022 = vmatprep.subr.mxu0 0.0
        %1023 = vmatpush2.msra.mxu0 0.0
        %1024 = vmatprep.subr.mxu0 0.0
        %1025 = vmatpush2.msra.mxu0 0.0
        %1026 = vmatprep.subr.mxu0 0.0
        %1027 = vmatpush2.msra.mxu0 0.0
        %1028 = vmatprep.subr.mxu0 0.0
        %1029 = vmatpush2.msra.mxu0 0.0
        %1030 = vmatprep.subr.mxu0 0.0
        %1031 = vmatpush2.msra.mxu0 0.0
        %1032 = vmatprep.subr.mxu0 0.0
        %1033 = vmatpush2.msra.mxu0 0.0
        %1034 = vmatprep.subr.mxu0 0.0
        %1035 = vmatpush2.msra.mxu0 0.0
        %1036 = vmatprep.subr.mxu0 0.0
        %1037 = vmatpush2.msra.mxu0 0.0
        %1038 = vmatprep.subr.mxu0 0.0
        %1039 = vmatpush2.msra.mxu0 0.0
        %1040 = vmatprep.subr.mxu0 0.0
        %1041 = vmatpush2.msra.mxu0 0.0
        %1042 = vmatprep.mubr.f32.mxu0 0.0
        %v1043 = vand.u32 %v974, 4294901760
        %v1044 = vsub.f32 %v974, %v1043
        %v1045 = vand.u32 %v1044, 4294901760
        %v1046 = vsub.f32 %v1044, %v1045
        %v1047 = vand.u32 %v1046, 4294901760
        %1048 = vmatmul.mubr.f32.gmra.mxu0 %v1047
        %v1049 = vpop.f32.mrf.mxu0
        %v1050 = vadd.f32 %v932, %v1049
        %v1051 = vpop.f32.mrf.mxu0
        %1052 = vdwg.mxu0
        %1053 = vmatprep.subr.mxu0 0.0
        %1054 = vmatpush1.msra.mxu0 0.0
        %1055 = vmatprep.subr.mxu0 0.0
        %1056 = vmatpush1.msra.mxu0 0.0
        %1057 = vmatprep.subr.mxu0 0.0
        %1058 = vmatpush1.msra.mxu0 0.0
        %1059 = vmatprep.subr.mxu0 0.0
        %1060 = vmatpush1.msra.mxu0 0.0
        %1061 = vmatprep.subr.mxu0 0.0
        %1062 = vmatpush1.msra.mxu0 0.0
        %1063 = vmatprep.subr.mxu0 0.0
        %1064 = vmatpush1.msra.mxu0 0.0
        %1065 = vmatprep.subr.mxu0 0.0
        %1066 = vmatpush1.msra.mxu0 0.0
        %1067 = vmatprep.subr.mxu0 0.0
        %1068 = vmatpush1.msra.mxu0 0.0
        %1069 = vmatprep.subr.mxu0 0.0
        %1070 = vmatpush1.msra.mxu0 0.0
        %1071 = vmatprep.subr.mxu0 0.0
        %1072 = vmatpush1.msra.mxu0 0.0
        %1073 = vmatprep.subr.mxu0 0.0
        %1074 = vmatpush1.msra.mxu0 0.0
        %1075 = vmatprep.subr.mxu0 0.0
        %1076 = vmatpush1.msra.mxu0 0.0
        %1077 = vmatprep.subr.mxu0 0.0
        %1078 = vmatpush1.msra.mxu0 0.0
        %1079 = vmatprep.subr.mxu0 0.0
        %1080 = vmatpush1.msra.mxu0 0.0
        %1081 = vmatprep.subr.mxu0 0.0
        %v1082 = vand.u32 %v929, 4294901760
        %v1083 = vsub.f32 %v929, %v1082
        %v1084 = vand.u32 %v1083, 4294901760
        %v1085 = vsub.f32 %v1083, %v1084
        %v1086 = vand.u32 %v1085, 4294901760
        %1087 = vmatpush1.msra.mxu0 %v1086
        %1088 = vmatprep.subr.mxu0 0.0
        %v1089 = vand.u32 %v928, 4294901760
        %v1090 = vsub.f32 %v928, %v1089
        %v1091 = vand.u32 %v1090, 4294901760
        %v1092 = vsub.f32 %v1090, %v1091
        %v1093 = vand.u32 %v1092, 4294901760
        %1094 = vmatpush1.msra.mxu0 %v1093
        %1095 = vmatprep.subr.mxu0 0.0
        %1096 = vmatpush2.msra.mxu0 0.0
        %1097 = vmatprep.subr.mxu0 0.0
        %1098 = vmatpush2.msra.mxu0 0.0
        %1099 = vmatprep.subr.mxu0 0.0
        %1100 = vmatpush2.msra.mxu0 0.0
        %1101 = vmatprep.subr.mxu0 0.0
        %1102 = vmatpush2.msra.mxu0 0.0
        %1103 = vmatprep.subr.mxu0 0.0
        %1104 = vmatpush2.msra.mxu0 0.0
        %1105 = vmatprep.subr.mxu0 0.0
        %1106 = vmatpush2.msra.mxu0 0.0
        %1107 = vmatprep.subr.mxu0 0.0
        %1108 = vmatpush2.msra.mxu0 0.0
        %1109 = vmatprep.subr.mxu0 0.0
        %1110 = vmatpush2.msra.mxu0 0.0
        %1111 = vmatprep.subr.mxu0 0.0
        %1112 = vmatpush2.msra.mxu0 0.0
        %1113 = vmatprep.subr.mxu0 0.0
        %1114 = vmatpush2.msra.mxu0 0.0
        %1115 = vmatprep.subr.mxu0 0.0
        %1116 = vmatpush2.msra.mxu0 0.0
        %1117 = vmatprep.subr.mxu0 0.0
        %1118 = vmatpush2.msra.mxu0 0.0
        %1119 = vmatprep.subr.mxu0 0.0
        %1120 = vmatpush2.msra.mxu0 0.0
        %1121 = vmatprep.subr.mxu0 0.0
        %1122 = vmatpush2.msra.mxu0 0.0
        %1123 = vmatprep.subr.mxu0 0.0
        %1124 = vmatpush2.msra.mxu0 0.0
        %1125 = vmatprep.subr.mxu0 0.0
        %1126 = vmatpush2.msra.mxu0 0.0
        %1127 = vmatprep.mubr.f32.mxu0 0.0
        %v1128 = vand.u32 %v974, 4294901760
        %1129 = vmatmul.mubr.f32.gmra.mxu0 %v1128
        %v1130 = vpop.f32.mrf.mxu0
        %v1131 = vadd.f32 %v1050, %v1130
        %v1132 = vpop.f32.mrf.mxu0
        %1133 = vdwg.mxu0
        %1134 = vmatprep.subr.mxu0 0.0
        %1135 = vmatpush1.msra.mxu0 0.0
        %1136 = vmatprep.subr.mxu0 0.0
        %1137 = vmatpush1.msra.mxu0 0.0
        %1138 = vmatprep.subr.mxu0 0.0
        %1139 = vmatpush1.msra.mxu0 0.0
        %1140 = vmatprep.subr.mxu0 0.0
        %1141 = vmatpush1.msra.mxu0 0.0
        %1142 = vmatprep.subr.mxu0 0.0
        %1143 = vmatpush1.msra.mxu0 0.0
        %1144 = vmatprep.subr.mxu0 0.0
        %1145 = vmatpush1.msra.mxu0 0.0
        %1146 = vmatprep.subr.mxu0 0.0
        %1147 = vmatpush1.msra.mxu0 0.0
        %1148 = vmatprep.subr.mxu0 0.0
        %1149 = vmatpush1.msra.mxu0 0.0
        %1150 = vmatprep.subr.mxu0 0.0
        %1151 = vmatpush1.msra.mxu0 0.0
        %1152 = vmatprep.subr.mxu0 0.0
        %1153 = vmatpush1.msra.mxu0 0.0
        %1154 = vmatprep.subr.mxu0 0.0
        %1155 = vmatpush1.msra.mxu0 0.0
        %1156 = vmatprep.subr.mxu0 0.0
        %1157 = vmatpush1.msra.mxu0 0.0
        %1158 = vmatprep.subr.mxu0 0.0
        %1159 = vmatpush1.msra.mxu0 0.0
        %1160 = vmatprep.subr.mxu0 0.0
        %1161 = vmatpush1.msra.mxu0 0.0
        %1162 = vmatprep.subr.mxu0 0.0
        %v1163 = vand.u32 %v929, 4294901760
        %v1164 = vsub.f32 %v929, %v1163
        %1165 = vmatpush1.msra.mxu0 %v1164
        %1166 = vmatprep.subr.mxu0 0.0
        %v1167 = vand.u32 %v928, 4294901760
        %v1168 = vsub.f32 %v928, %v1167
        %1169 = vmatpush1.msra.mxu0 %v1168
        %1170 = vmatprep.subr.mxu0 0.0
        %1171 = vmatpush2.msra.mxu0 0.0
        %1172 = vmatprep.subr.mxu0 0.0
        %1173 = vmatpush2.msra.mxu0 0.0
        %1174 = vmatprep.subr.mxu0 0.0
        %1175 = vmatpush2.msra.mxu0 0.0
        %1176 = vmatprep.subr.mxu0 0.0
        %1177 = vmatpush2.msra.mxu0 0.0
        %1178 = vmatprep.subr.mxu0 0.0
        %1179 = vmatpush2.msra.mxu0 0.0
        %1180 = vmatprep.subr.mxu0 0.0
        %1181 = vmatpush2.msra.mxu0 0.0
        %1182 = vmatprep.subr.mxu0 0.0
        %1183 = vmatpush2.msra.mxu0 0.0
        %1184 = vmatprep.subr.mxu0 0.0
        %1185 = vmatpush2.msra.mxu0 0.0
        %1186 = vmatprep.subr.mxu0 0.0
        %1187 = vmatpush2.msra.mxu0 0.0
        %1188 = vmatprep.subr.mxu0 0.0
        %1189 = vmatpush2.msra.mxu0 0.0
        %1190 = vmatprep.subr.mxu0 0.0
        %1191 = vmatpush2.msra.mxu0 0.0
        %1192 = vmatprep.subr.mxu0 0.0
        %1193 = vmatpush2.msra.mxu0 0.0
        %1194 = vmatprep.subr.mxu0 0.0
        %1195 = vmatpush2.msra.mxu0 0.0
        %1196 = vmatprep.subr.mxu0 0.0
        %1197 = vmatpush2.msra.mxu0 0.0
        %1198 = vmatprep.subr.mxu0 0.0
        %1199 = vmatpush2.msra.mxu0 0.0
        %1200 = vmatprep.subr.mxu0 0.0
        %1201 = vmatpush2.msra.mxu0 0.0
        %1202 = vmatprep.mubr.f32.mxu0 0.0
        %v1203 = vand.u32 %v974, 4294901760
        %v1204 = vsub.f32 %v974, %v1203
        %1205 = vmatmul.mubr.f32.gmra.mxu0 %v1204
        %v1206 = vpop.f32.mrf.mxu0
        %v1207 = vadd.f32 %v1131, %v1206
        %v1208 = vpop.f32.mrf.mxu0
        %1209 = vdwg.mxu0
        %1210 = vmatprep.subr.mxu0 0.0
        %1211 = vmatpush1.msra.mxu0 0.0
        %1212 = vmatprep.subr.mxu0 0.0
        %1213 = vmatpush1.msra.mxu0 0.0
        %1214 = vmatprep.subr.mxu0 0.0
        %1215 = vmatpush1.msra.mxu0 0.0
        %1216 = vmatprep.subr.mxu0 0.0
        %1217 = vmatpush1.msra.mxu0 0.0
        %1218 = vmatprep.subr.mxu0 0.0
        %1219 = vmatpush1.msra.mxu0 0.0
        %1220 = vmatprep.subr.mxu0 0.0
        %1221 = vmatpush1.msra.mxu0 0.0
        %1222 = vmatprep.subr.mxu0 0.0
        %1223 = vmatpush1.msra.mxu0 0.0
        %1224 = vmatprep.subr.mxu0 0.0
        %1225 = vmatpush1.msra.mxu0 0.0
        %1226 = vmatprep.subr.mxu0 0.0
        %1227 = vmatpush1.msra.mxu0 0.0
        %1228 = vmatprep.subr.mxu0 0.0
        %1229 = vmatpush1.msra.mxu0 0.0
        %1230 = vmatprep.subr.mxu0 0.0
        %1231 = vmatpush1.msra.mxu0 0.0
        %1232 = vmatprep.subr.mxu0 0.0
        %1233 = vmatpush1.msra.mxu0 0.0
        %1234 = vmatprep.subr.mxu0 0.0
        %1235 = vmatpush1.msra.mxu0 0.0
        %1236 = vmatprep.subr.mxu0 0.0
        %1237 = vmatpush1.msra.mxu0 0.0
        %1238 = vmatprep.subr.mxu0 0.0
        %v1239 = vand.u32 %v929, 4294901760
        %1240 = vmatpush1.msra.mxu0 %v1239
        %1241 = vmatprep.subr.mxu0 0.0
        %v1242 = vand.u32 %v928, 4294901760
        %1243 = vmatpush1.msra.mxu0 %v1242
        %1244 = vmatprep.subr.mxu0 0.0
        %1245 = vmatpush2.msra.mxu0 0.0
        %1246 = vmatprep.subr.mxu0 0.0
        %1247 = vmatpush2.msra.mxu0 0.0
        %1248 = vmatprep.subr.mxu0 0.0
        %1249 = vmatpush2.msra.mxu0 0.0
        %1250 = vmatprep.subr.mxu0 0.0
        %1251 = vmatpush2.msra.mxu0 0.0
        %1252 = vmatprep.subr.mxu0 0.0
        %1253 = vmatpush2.msra.mxu0 0.0
        %1254 = vmatprep.subr.mxu0 0.0
        %1255 = vmatpush2.msra.mxu0 0.0
        %1256 = vmatprep.subr.mxu0 0.0
        %1257 = vmatpush2.msra.mxu0 0.0
        %1258 = vmatprep.subr.mxu0 0.0
        %1259 = vmatpush2.msra.mxu0 0.0
        %1260 = vmatprep.subr.mxu0 0.0
        %1261 = vmatpush2.msra.mxu0 0.0
        %1262 = vmatprep.subr.mxu0 0.0
        %1263 = vmatpush2.msra.mxu0 0.0
        %1264 = vmatprep.subr.mxu0 0.0
        %1265 = vmatpush2.msra.mxu0 0.0
        %1266 = vmatprep.subr.mxu0 0.0
        %1267 = vmatpush2.msra.mxu0 0.0
        %1268 = vmatprep.subr.mxu0 0.0
        %1269 = vmatpush2.msra.mxu0 0.0
        %1270 = vmatprep.subr.mxu0 0.0
        %1271 = vmatpush2.msra.mxu0 0.0
        %1272 = vmatprep.subr.mxu0 0.0
        %1273 = vmatpush2.msra.mxu0 0.0
        %1274 = vmatprep.subr.mxu0 0.0
        %1275 = vmatpush2.msra.mxu0 0.0
        %1276 = vmatprep.mubr.f32.mxu0 0.0
        %v1277 = vand.u32 %v974, 4294901760
        %v1278 = vsub.f32 %v974, %v1277
        %v1279 = vand.u32 %v1278, 4294901760
        %1280 = vmatmul.mubr.f32.gmra.mxu0 %v1279
        %v1281 = vpop.f32.mrf.mxu0
        %v1282 = vadd.f32 %v1207, %v1281
        %v1283 = vpop.f32.mrf.mxu0
        %1284 = vdwg.mxu0
        %1285 = vmatprep.subr.mxu0 0.0
        %1286 = vmatpush1.msra.mxu0 0.0
        %1287 = vmatprep.subr.mxu0 0.0
        %1288 = vmatpush1.msra.mxu0 0.0
        %1289 = vmatprep.subr.mxu0 0.0
        %1290 = vmatpush1.msra.mxu0 0.0
        %1291 = vmatprep.subr.mxu0 0.0
        %1292 = vmatpush1.msra.mxu0 0.0
        %1293 = vmatprep.subr.mxu0 0.0
        %1294 = vmatpush1.msra.mxu0 0.0
        %1295 = vmatprep.subr.mxu0 0.0
        %1296 = vmatpush1.msra.mxu0 0.0
        %1297 = vmatprep.subr.mxu0 0.0
        %1298 = vmatpush1.msra.mxu0 0.0
        %1299 = vmatprep.subr.mxu0 0.0
        %1300 = vmatpush1.msra.mxu0 0.0
        %1301 = vmatprep.subr.mxu0 0.0
        %1302 = vmatpush1.msra.mxu0 0.0
        %1303 = vmatprep.subr.mxu0 0.0
        %1304 = vmatpush1.msra.mxu0 0.0
        %1305 = vmatprep.subr.mxu0 0.0
        %1306 = vmatpush1.msra.mxu0 0.0
        %1307 = vmatprep.subr.mxu0 0.0
        %1308 = vmatpush1.msra.mxu0 0.0
        %1309 = vmatprep.subr.mxu0 0.0
        %1310 = vmatpush1.msra.mxu0 0.0
        %1311 = vmatprep.subr.mxu0 0.0
        %1312 = vmatpush1.msra.mxu0 0.0
        %1313 = vmatprep.subr.mxu0 0.0
        %v1314 = vand.u32 %v929, 4294901760
        %v1315 = vsub.f32 %v929, %v1314
        %v1316 = vand.u32 %v1315, 4294901760
        %1317 = vmatpush1.msra.mxu0 %v1316
        %1318 = vmatprep.subr.mxu0 0.0
        %v1319 = vand.u32 %v928, 4294901760
        %v1320 = vsub.f32 %v928, %v1319
        %v1321 = vand.u32 %v1320, 4294901760
        %1322 = vmatpush1.msra.mxu0 %v1321
        %1323 = vmatprep.subr.mxu0 0.0
        %1324 = vmatpush2.msra.mxu0 0.0
        %1325 = vmatprep.subr.mxu0 0.0
        %1326 = vmatpush2.msra.mxu0 0.0
        %1327 = vmatprep.subr.mxu0 0.0
        %1328 = vmatpush2.msra.mxu0 0.0
        %1329 = vmatprep.subr.mxu0 0.0
        %1330 = vmatpush2.msra.mxu0 0.0
        %1331 = vmatprep.subr.mxu0 0.0
        %1332 = vmatpush2.msra.mxu0 0.0
        %1333 = vmatprep.subr.mxu0 0.0
        %1334 = vmatpush2.msra.mxu0 0.0
        %1335 = vmatprep.subr.mxu0 0.0
        %1336 = vmatpush2.msra.mxu0 0.0
        %1337 = vmatprep.subr.mxu0 0.0
        %1338 = vmatpush2.msra.mxu0 0.0
        %1339 = vmatprep.subr.mxu0 0.0
        %1340 = vmatpush2.msra.mxu0 0.0
        %1341 = vmatprep.subr.mxu0 0.0
        %1342 = vmatpush2.msra.mxu0 0.0
        %1343 = vmatprep.subr.mxu0 0.0
        %1344 = vmatpush2.msra.mxu0 0.0
        %1345 = vmatprep.subr.mxu0 0.0
        %1346 = vmatpush2.msra.mxu0 0.0
        %1347 = vmatprep.subr.mxu0 0.0
        %1348 = vmatpush2.msra.mxu0 0.0
        %1349 = vmatprep.subr.mxu0 0.0
        %1350 = vmatpush2.msra.mxu0 0.0
        %1351 = vmatprep.subr.mxu0 0.0
        %1352 = vmatpush2.msra.mxu0 0.0
        %1353 = vmatprep.subr.mxu0 0.0
        %1354 = vmatpush2.msra.mxu0 0.0
        %1355 = vmatprep.mubr.f32.mxu0 0.0
        %v1356 = vand.u32 %v974, 4294901760
        %1357 = vmatmul.mubr.f32.gmra.mxu0 %v1356
        %v1358 = vpop.f32.mrf.mxu0
        %v1359 = vadd.f32 %v1282, %v1358
        %v1360 = vpop.f32.mrf.mxu0
        %1361 = vdwg.mxu0
        %1362 = vmatprep.subr.mxu0 0.0
        %1363 = vmatpush1.msra.mxu0 0.0
        %1364 = vmatprep.subr.mxu0 0.0
        %1365 = vmatpush1.msra.mxu0 0.0
        %1366 = vmatprep.subr.mxu0 0.0
        %1367 = vmatpush1.msra.mxu0 0.0
        %1368 = vmatprep.subr.mxu0 0.0
        %1369 = vmatpush1.msra.mxu0 0.0
        %1370 = vmatprep.subr.mxu0 0.0
        %1371 = vmatpush1.msra.mxu0 0.0
        %1372 = vmatprep.subr.mxu0 0.0
        %1373 = vmatpush1.msra.mxu0 0.0
        %1374 = vmatprep.subr.mxu0 0.0
        %1375 = vmatpush1.msra.mxu0 0.0
        %1376 = vmatprep.subr.mxu0 0.0
        %1377 = vmatpush1.msra.mxu0 0.0
        %1378 = vmatprep.subr.mxu0 0.0
        %1379 = vmatpush1.msra.mxu0 0.0
        %1380 = vmatprep.subr.mxu0 0.0
        %1381 = vmatpush1.msra.mxu0 0.0
        %1382 = vmatprep.subr.mxu0 0.0
        %1383 = vmatpush1.msra.mxu0 0.0
        %1384 = vmatprep.subr.mxu0 0.0
        %1385 = vmatpush1.msra.mxu0 0.0
        %1386 = vmatprep.subr.mxu0 0.0
        %1387 = vmatpush1.msra.mxu0 0.0
        %1388 = vmatprep.subr.mxu0 0.0
        %1389 = vmatpush1.msra.mxu0 0.0
        %1390 = vmatprep.subr.mxu0 0.0
        %v1391 = vand.u32 %v929, 4294901760
        %1392 = vmatpush1.msra.mxu0 %v1391
        %1393 = vmatprep.subr.mxu0 0.0
        %v1394 = vand.u32 %v928, 4294901760
        %1395 = vmatpush1.msra.mxu0 %v1394
        %1396 = vmatprep.subr.mxu0 0.0
        %1397 = vmatpush2.msra.mxu0 0.0
        %1398 = vmatprep.subr.mxu0 0.0
        %1399 = vmatpush2.msra.mxu0 0.0
        %1400 = vmatprep.subr.mxu0 0.0
        %1401 = vmatpush2.msra.mxu0 0.0
        %1402 = vmatprep.subr.mxu0 0.0
        %1403 = vmatpush2.msra.mxu0 0.0
        %1404 = vmatprep.subr.mxu0 0.0
        %1405 = vmatpush2.msra.mxu0 0.0
        %1406 = vmatprep.subr.mxu0 0.0
        %1407 = vmatpush2.msra.mxu0 0.0
        %1408 = vmatprep.subr.mxu0 0.0
        %1409 = vmatpush2.msra.mxu0 0.0
        %1410 = vmatprep.subr.mxu0 0.0
        %1411 = vmatpush2.msra.mxu0 0.0
        %1412 = vmatprep.subr.mxu0 0.0
        %1413 = vmatpush2.msra.mxu0 0.0
        %1414 = vmatprep.subr.mxu0 0.0
        %1415 = vmatpush2.msra.mxu0 0.0
        %1416 = vmatprep.subr.mxu0 0.0
        %1417 = vmatpush2.msra.mxu0 0.0
        %1418 = vmatprep.subr.mxu0 0.0
        %1419 = vmatpush2.msra.mxu0 0.0
        %1420 = vmatprep.subr.mxu0 0.0
        %1421 = vmatpush2.msra.mxu0 0.0
        %1422 = vmatprep.subr.mxu0 0.0
        %1423 = vmatpush2.msra.mxu0 0.0
        %1424 = vmatprep.subr.mxu0 0.0
        %1425 = vmatpush2.msra.mxu0 0.0
        %1426 = vmatprep.subr.mxu0 0.0
        %1427 = vmatpush2.msra.mxu0 0.0
        %1428 = vmatprep.mubr.f32.mxu0 0.0
        %v1429 = vand.u32 %v974, 4294901760
        %1430 = vmatmul.mubr.f32.gmra.mxu0 %v1429
        %v1431 = vpop.f32.mrf.mxu0
        %v1432 = vadd.f32 %v1359, %v1431
        %v1433 = vpop.f32.mrf.mxu0
        %1434 = vdwg.mxu0
        %1435 = vst [vmem:[%s148] sm:$0x1] %v1432
        %s1436 = sand.u32 %s71, 1
        %s1437 = scalar_lea.sflag [#allocation3], %s1436
        %s1438 = sand.u32 %s71, 1
        %s1439 = scalar_lea.vmem [#allocation2], %s1438
        // Predicated region
        $region29: #{tpu_custom_call.1} parent=27 // pred_check
          %p1440 = pneg %p81
        $region30: #{tpu_custom_call.1} parent=27 // pred_check_branch
          %1442 = sbr.rel (%p1440) target = $region32
        $region31: #{tpu_custom_call.1} parent=27 // pred_region
          %s1444 = ssub.s32 16, 16
          %1445 = vsyncadd %s1437, %s1444
          %s1446 = smul.addr %s16, 16
          %s1447 = scalar_lea.hbm %s2, %s1446
          %s1449 = sshll.u32 %s1439, 4
          %s1450 = int_to_ptr.vmem [resolvable:$true] %s1449
          %1452 = dma.vmem_to_hbm [thread:$0]  %s1450, 16, %s1447, %s1437
        $region32: #{tpu_custom_call.1} parent=27 // pred_fallthru
          _
      $region28: #{tpu_custom_call.1} parent=5 // pred_fallthru
        _
      %p1453 = scmp.le.s32.totalorder 2, %s11
      // Predicated region
      $region33: #{tpu_custom_call.1} parent=5 // pred_check
        %p1454 = pneg %p1453
      $region34: #{tpu_custom_call.1} parent=5 // pred_check_branch
        %1456 = sbr.rel (%p1454) target = $region36
      $region35: #{tpu_custom_call.1} parent=5 // pred_region
        %s1457 = ssub.s32 %s11, 2
        // Predicated region
        $region37: #{tpu_custom_call.1} parent=35 // pred_check
          %p1458 = pneg %p87
        $region38: #{tpu_custom_call.1} parent=35 // pred_check_branch
          %1460 = sbr.rel (%p1458) target = $region40
        $region39: #{tpu_custom_call.1} parent=35 // pred_region
          %s1461 = sand.u32 %s72, 1
          %s1462 = scalar_lea.sflag [#allocation3], %s1461
          %s1463 = sand.u32 %s72, 1
          %s1464 = scalar_lea.vmem [#allocation2], %s1463
          %1465 = dma.done %s1462, 16
        $region40: #{tpu_custom_call.1} parent=35 // pred_fallthru
          _
      $region36: #{tpu_custom_call.1} parent=5 // pred_fallthru
        _
    $region6: #{tpu_custom_call.1} parent=1 // loop_footer
      %s15 = sadd.s32 1, %s11
    $region7: #{tpu_custom_call.1} parent=1 // loop_footer_branch
      %10 = sbr.rel target = $region3
    $region8: #{tpu_custom_call.1} parent=1 // loop_exit
      _
    %1466 = vsyncpa [#allocation3], 1
    %s1467 = scalar_lea.sflag [#allocation3], 1
    %1468 = vsyncpa %s1467, 1

</llo_original>
